<compile_context>
chip_gen: v7x
topology: tpu7x:2x2x1
jax: 0.10.0
libtpu: 0.0.40
codegen_flags: <defaults>
</compile_context>

<pallas_src>
import functools

import jax
import jax.numpy as jnp
from jax.experimental import pallas as pl
from jax.experimental.pallas import tpu as pltpu

WIN_SIZE = 11
WIN_SIGMA = 1.5
K1, K2 = 0.01, 0.03
DATA_RANGE = 1.0
ALPHA, BETA, GAMMA = 0.5, 0.3, 0.2


# ----------------------------- glue (plain JAX) -----------------------------
def _gaussian_1d(size, sigma):
    coords = jnp.arange(size, dtype=jnp.float32) - size // 2
    g = jnp.exp(-(coords ** 2) / (2.0 * sigma ** 2))
    return g / jnp.sum(g)


def _conv_matrix(n_in, win):
    """(n_out, n_in) matrix M so that M @ v == valid 1D correlation of v with win."""
    size = win.shape[0]
    n_out = n_in - size + 1
    rows = []
    for o in range(n_out):
        rows.append(jnp.zeros((n_in,), jnp.float32).at[o:o + size].set(win))
    return jnp.stack(rows, axis=0)


# ------------------------------- Pallas kernel ------------------------------
def combined_loss_kernel(r_ref, x_ref, gwt_ref, ght_ref, out_ref, *, tb, nc):
    i = pl.program_id(0)
    # Only the last block can be ragged; loop only over its valid images.
    n_valid = jnp.minimum(tb, nc - i * tb)

    gwt = gwt_ref[...]          # (W, Wo)  f32, loop-invariant
    ght = ght_ref[...]          # (H, Ho)  f32, loop-invariant

    c1 = (K1 * DATA_RANGE) ** 2
    c2 = (K2 * DATA_RANGE) ** 2

    def gfilt(a):               # (H, W) f32 -> (Wo, Ho) f32 (orientation is irrelevant)
        t = jnp.dot(a, gwt, preferred_element_type=jnp.float32)        # (H, Wo)
        return jnp.dot(t.T, ght, preferred_element_type=jnp.float32)   # (Wo, Ho)

    def body(b, carry):
        ssq, sab, sss = carry
        # DMA'd in native dtype; upcast after load.  Matmuls stay f32 because
        # sigma = E[a^2] - mu^2 is a catastrophic cancellation (bf16 drifts).
        r = r_ref[b].astype(jnp.float32)     # (H, W)
        x = x_ref[b].astype(jnp.float32)

        d = r - x
        ssq = ssq + jnp.sum(d * d)
        sab = sab + jnp.sum(jnp.abs(d))

        r01 = (r + 1.0) * 0.5
        x01 = (x + 1.0) * 0.5
        mu1 = gfilt(r01)
        mu2 = gfilt(x01)
        e11 = gfilt(r01 * r01)
        e22 = gfilt(x01 * x01)
        e12 = gfilt(r01 * x01)

        mu1_sq = mu1 * mu1
        mu2_sq = mu2 * mu2
        mu1_mu2 = mu1 * mu2
        s11 = e11 - mu1_sq
        s22 = e22 - mu2_sq
        s12 = e12 - mu1_mu2
        cs = (2.0 * s12 + c2) / (s11 + s22 + c2)
        ssim_map = ((2.0 * mu1_mu2 + c1) / (mu1_sq + mu2_sq + c1)) * cs
        sss = sss + jnp.sum(ssim_map)
        return ssq, sab, sss

    zero = jnp.float32(0.0)
    ssq, sab, sss = jax.lax.fori_loop(0, n_valid, body, (zero, zero, zero))

    # Lane-dense (1, 8, 128) per-block partial-sum tile: lane0=ssq, lane1=sab,
    # lane2=ssim_sum (rows are duplicates; the wrapper reads row 0 only).
    lane = jax.lax.broadcasted_iota(jnp.int32, (8, 128), 1)
    vals = (jnp.where(lane == 0, ssq, 0.0)
            + jnp.where(lane == 1, sab, 0.0)
            + jnp.where(lane == 2, sss, 0.0))
    out_ref[...] = vals.reshape(1, 8, 128)


# --------------------------------- wrapper ----------------------------------
def combined_loss(recon, x, *, tile_b=None):
    N, C, H, W = x.shape
    assert recon.shape == x.shape
    assert H >= WIN_SIZE and W >= WIN_SIZE, "SSIM needs spatial dims >= 11"
    NC = N * C

    win = _gaussian_1d(WIN_SIZE, WIN_SIGMA)
    gh = _conv_matrix(H, win)                 # (Ho, H)
    gw = _conv_matrix(W, win)                 # (Wo, W)
    Ho, Wo = gh.shape[0], gw.shape[0]
    gwt = gw.T                                # (W, Wo)
    ght = gh.T                                # (H, Ho)

    # VMEM budget from the actual part (64 MiB on v7x, 128 MiB on v5e/v6e).
    try:
        vmem_cap = int(pltpu.get_tpu_info().vmem_capacity_bytes)
    except Exception:  # conservative fallback
        vmem_cap = 64 * 1024 * 1024
    vmem_limit = min(int(vmem_cap * 0.7), 100 * 1024 * 1024)
    budget = int(vmem_limit * 0.7)

    if tile_b is None:
        in_itemsize = recon.dtype.itemsize + x.dtype.itemsize
        per_img = 2 * in_itemsize * H * W                      # double-buffered inputs
        const = 4 * (2 * (W * Wo + H * Ho)                     # conv matrices
                     + 6 * H * W + 2 * H * Wo + 12 * Wo * Ho)  # in-loop f32 temps
        cap_b = (budget - const) // per_img if budget > const else 1
        cap_b = int(max(1, min(cap_b, 128, NC)))
        # Prefer a tile that divides N*C -> no wrapper zero-pad HBM pass.
        best_div = max(d for d in range(1, cap_b + 1) if NC % d == 0)
        tile_b = best_div if best_div >= max(1, cap_b // 2) else cap_b
    tile_b = int(max(1, tile_b))

    G = (NC + tile_b - 1) // tile_b
    NC_pad = G * tile_b

    r = recon.reshape(NC, H, W)
    xx = x.reshape(NC, H, W)
    if NC_pad != NC:  # rare: only when tile_b does not divide N*C
        r = jnp.concatenate([r, jnp.zeros((NC_pad - NC, H, W), r.dtype)], axis=0)
        xx = jnp.concatenate([xx, jnp.zeros((NC_pad - NC, H, W), xx.dtype)], axis=0)

    kernel = functools.partial(combined_loss_kernel, tb=tile_b, nc=NC)

    partials = pl.pallas_call(
        kernel,
        out_shape=jax.ShapeDtypeStruct((G, 8, 128), jnp.float32),
        grid_spec=pltpu.PrefetchScalarGridSpec(
            num_scalar_prefetch=0,
            grid=(G,),
            in_specs=[
                pl.BlockSpec((tile_b, H, W), lambda i: (i, 0, 0)),
                pl.BlockSpec((tile_b, H, W), lambda i: (i, 0, 0)),
                pl.BlockSpec((W, Wo), lambda i: (0, 0)),   # constant -> no re-DMA
                pl.BlockSpec((H, Ho), lambda i: (0, 0)),
            ],
            out_specs=pl.BlockSpec((1, 8, 128), lambda i: (i, 0, 0)),
        ),
        compiler_params=pltpu.CompilerParams(
            # TODO(synk): evaluate pltpu.CORE_PARALLEL on v7x (2 TCs/chip);
            # plain "parallel" is a no-op on single-TC v5e/v6e.
            dimension_semantics=("parallel",),
            vmem_limit_bytes=vmem_limit),
    )(r, xx, gwt, ght)

    # Final tiny reductions / normalization in plain JAX (pairwise f32 sums).
    ssq = jnp.sum(partials[:, 0, 0])
    sab = jnp.sum(partials[:, 0, 1])
    sss = jnp.sum(partials[:, 0, 2])
    n_el = float(NC * H * W)
    mse = ssq / n_el
    l1 = sab / n_el
    ssim_val = sss / float(NC * Ho * Wo)
    return ALPHA * mse + BETA * l1 + GAMMA * (1.0 - ssim_val)


# ---------------------------- pure-JAX reference ----------------------------
def combined_loss_ref(recon, x):
    N, C, H, W = x.shape
    win = _gaussian_1d(WIN_SIZE, WIN_SIGMA)
    gh = _conv_matrix(H, win)
    gw = _conv_matrix(W, win)

    def gfilt(a):  # a: (N, C, H, W)
        t = jnp.einsum('oh,nchw->ncow', gh, a)
        return jnp.einsum('pw,ncow->ncop', gw, t)

    d = recon - x
    mse = jnp.mean(d * d)
    l1 = jnp.mean(jnp.abs(d))

    r01 = (recon + 1.0) * 0.5
    x01 = (x + 1.0) * 0.5
    mu1, mu2 = gfilt(r01), gfilt(x01)
    s11 = gfilt(r01 * r01) - mu1 * mu1
    s22 = gfilt(x01 * x01) - mu2 * mu2
    s12 = gfilt(r01 * x01) - mu1 * mu2
    c1 = (K1 * DATA_RANGE) ** 2
    c2 = (K2 * DATA_RANGE) ** 2
    cs = (2 * s12 + c2) / (s11 + s22 + c2)
    ssim_map = ((2 * mu1 * mu2 + c1) / (mu1 * mu1 + mu2 * mu2 + c1)) * cs
    ssim_val = jnp.mean(ssim_map)
    return ALPHA * mse + BETA * l1 + GAMMA * (1.0 - ssim_val)


if __name__ == "__main__":
    key = jax.random.PRNGKey(0)
    k1, k2 = jax.random.split(key)
    N, C, H, W = 2, 4, 16, 16
    # inputs in [-1, 1] as implied by the (x + 1) / 2 rescaling in forward()
    x = jax.random.uniform(k1, (N, C, H, W), jnp.float32, minval=-1.0, maxval=1.0)
    recon = jnp.clip(
        x + 0.1 * jax.random.normal(k2, (N, C, H, W), jnp.float32), -1.0, 1.0)

    ref = combined_loss_ref(recon, x)

    # main path: tile_b auto-picked (divides N*C=8 -> single block, no padding)
    loss = combined_loss(recon, x)
    jax.block_until_ready(loss)
    assert jnp.allclose(loss, ref, rtol=1e-3, atol=1e-4), (loss, ref)

    # multi-block + ragged-tail path (NC=8, tile_b=3 -> 3 blocks, 1 padded image)
    loss2 = combined_loss(recon, x, tile_b=3)
    jax.block_until_ready(loss2)
    assert jnp.allclose(loss2, ref, rtol=1e-3, atol=1e-4), (loss2, ref)

    print("KERNEL_OK")
</pallas_src>

<mosaic_0001>
module attributes {stable_mosaic.version = 11 : i64} {
  func.func @combined_loss_kernel(%arg0: i32, %arg1: memref<8x16x16xf32, #tpu.memory_space<vmem>>, %arg2: memref<8x16x16xf32, #tpu.memory_space<vmem>>, %arg3: memref<16x6xf32, #tpu.memory_space<vmem>>, %arg4: memref<16x6xf32, #tpu.memory_space<vmem>>, %arg5: memref<1x8x128xf32, #tpu.memory_space<vmem>>) attributes {dimension_semantics = [#tpu.dimension_semantics<parallel>], iteration_bounds = array<i64: 1>, scalar_prefetch = 0 : i64, scratch_operands = 0 : i64, tpu.core_type = #tpu.core_type<tc>, window_params = [{transform_indices = @transform_0, window_bounds = array<i64: 8, 16, 16>}, {transform_indices = @transform_1, window_bounds = array<i64: 8, 16, 16>}, {pipeline_mode = #tpu.pipeline_mode<synchronous>, transform_indices = @transform_2, window_bounds = array<i64: 16, 6>}, {pipeline_mode = #tpu.pipeline_mode<synchronous>, transform_indices = @transform_3, window_bounds = array<i64: 16, 6>}, {transform_indices = @transform_4, window_bounds = array<i64: 1, 8, 128>}]} {
    %c8_i32 = arith.constant 8 : i32
    %0 = arith.muli %arg0, %c8_i32 : i32
    %c8_i32_0 = arith.constant 8 : i32
    %1 = arith.subi %c8_i32_0, %0 : i32
    %c8_i32_1 = arith.constant 8 : i32
    %2 = arith.minsi %c8_i32_1, %1 : i32
    %c0 = arith.constant 0 : index
    %c0_2 = arith.constant 0 : index
    %3 = vector.load %arg3[%c0, %c0_2] : memref<16x6xf32, #tpu.memory_space<vmem>>, vector<16x6xf32>
    %c0_3 = arith.constant 0 : index
    %c0_4 = arith.constant 0 : index
    %4 = vector.load %arg4[%c0_3, %c0_4] : memref<16x6xf32, #tpu.memory_space<vmem>>, vector<16x6xf32>
    %c0_i32 = arith.constant 0 : i32
    %cst = arith.constant 0.000000e+00 : f32
    %cst_5 = arith.constant 0.000000e+00 : f32
    %cst_6 = arith.constant 0.000000e+00 : f32
    %5 = arith.subi %2, %c0_i32 : i32
    %6 = arith.addi %c0_i32, %5 : i32
    %c1_i32 = arith.constant 1 : i32
    %7:3 = scf.for %arg6 = %c0_i32 to %6 step %c1_i32 iter_args(%arg7 = %cst, %arg8 = %cst_5, %arg9 = %cst_6) -> (f32, f32, f32)  : i32 {
      %28 = arith.index_cast %arg6 : i32 to index
      %c0_15 = arith.constant 0 : index
      %c0_16 = arith.constant 0 : index
      %29 = vector.load %arg1[%28, %c0_15, %c0_16] : memref<8x16x16xf32, #tpu.memory_space<vmem>>, vector<1x16x16xf32>
      %30 = vector.shape_cast %29 : vector<1x16x16xf32> to vector<16x16xf32>
      %31 = arith.index_cast %arg6 : i32 to index
      %c0_17 = arith.constant 0 : index
      %c0_18 = arith.constant 0 : index
      %32 = vector.load %arg2[%31, %c0_17, %c0_18] : memref<8x16x16xf32, #tpu.memory_space<vmem>>, vector<1x16x16xf32>
      %33 = vector.shape_cast %32 : vector<1x16x16xf32> to vector<16x16xf32>
      %34 = arith.subf %30, %33 : vector<16x16xf32>
      %35 = arith.mulf %34, %34 : vector<16x16xf32>
      %36 = vector.shape_cast %35 : vector<16x16xf32> to vector<1x16x16xf32>
      %cst_19 = arith.constant dense<0.000000e+00> : vector<1xf32>
      %37 = vector.multi_reduction <add>, %36, %cst_19 [1, 2] : vector<1x16x16xf32> to vector<1xf32>
      %38 = vector.shape_cast %37 : vector<1xf32> to vector<1x1x1xf32>
      %39 = vector.extract %38[0, 0, 0] : f32 from vector<1x1x1xf32>
      %40 = arith.addf %arg7, %39 : f32
      %41 = math.absf %34 : vector<16x16xf32>
      %42 = vector.shape_cast %41 : vector<16x16xf32> to vector<1x16x16xf32>
      %cst_20 = arith.constant dense<0.000000e+00> : vector<1xf32>
      %43 = vector.multi_reduction <add>, %42, %cst_20 [1, 2] : vector<1x16x16xf32> to vector<1xf32>
      %44 = vector.shape_cast %43 : vector<1xf32> to vector<1x1x1xf32>
      %45 = vector.extract %44[0, 0, 0] : f32 from vector<1x1x1xf32>
      %46 = arith.addf %arg8, %45 : f32
      %cst_21 = arith.constant 1.000000e+00 : f32
      %47 = vector.broadcast %cst_21 : f32 to vector<16x16xf32>
      %48 = arith.addf %30, %47 : vector<16x16xf32>
      %cst_22 = arith.constant 5.000000e-01 : f32
      %49 = vector.broadcast %cst_22 : f32 to vector<16x16xf32>
      %50 = arith.mulf %48, %49 : vector<16x16xf32>
      %cst_23 = arith.constant 1.000000e+00 : f32
      %51 = vector.broadcast %cst_23 : f32 to vector<16x16xf32>
      %52 = arith.addf %33, %51 : vector<16x16xf32>
      %cst_24 = arith.constant 5.000000e-01 : f32
      %53 = vector.broadcast %cst_24 : f32 to vector<16x16xf32>
      %54 = arith.mulf %52, %53 : vector<16x16xf32>
      %cst_25 = arith.constant dense<0.000000e+00> : vector<16x6xf32>
      %55 = tpu.matmul %50, %3, %cst_25 {dimension_numbers = #tpu.dot_dimension_numbers<[1], [0], [0], [1], [0, 0, 1, 1], [], []>} : vector<16x16xf32>, vector<16x6xf32>, vector<16x6xf32> -> vector<16x6xf32>
      %56 = tpu.transpose %55, [1, 0] : vector<16x6xf32> -> vector<6x16xf32>
      %cst_26 = arith.constant dense<0.000000e+00> : vector<6x6xf32>
      %57 = tpu.matmul %56, %4, %cst_26 {dimension_numbers = #tpu.dot_dimension_numbers<[1], [0], [0], [1], [0, 0, 1, 1], [], []>} : vector<6x16xf32>, vector<16x6xf32>, vector<6x6xf32> -> vector<6x6xf32>
      %cst_27 = arith.constant dense<0.000000e+00> : vector<16x6xf32>
      %58 = tpu.matmul %54, %3, %cst_27 {dimension_numbers = #tpu.dot_dimension_numbers<[1], [0], [0], [1], [0, 0, 1, 1], [], []>} : vector<16x16xf32>, vector<16x6xf32>, vector<16x6xf32> -> vector<16x6xf32>
      %59 = tpu.transpose %58, [1, 0] : vector<16x6xf32> -> vector<6x16xf32>
      %cst_28 = arith.constant dense<0.000000e+00> : vector<6x6xf32>
      %60 = tpu.matmul %59, %4, %cst_28 {dimension_numbers = #tpu.dot_dimension_numbers<[1], [0], [0], [1], [0, 0, 1, 1], [], []>} : vector<6x16xf32>, vector<16x6xf32>, vector<6x6xf32> -> vector<6x6xf32>
      %61 = arith.mulf %50, %50 : vector<16x16xf32>
      %cst_29 = arith.constant dense<0.000000e+00> : vector<16x6xf32>
      %62 = tpu.matmul %61, %3, %cst_29 {dimension_numbers = #tpu.dot_dimension_numbers<[1], [0], [0], [1], [0, 0, 1, 1], [], []>} : vector<16x16xf32>, vector<16x6xf32>, vector<16x6xf32> -> vector<16x6xf32>
      %63 = tpu.transpose %62, [1, 0] : vector<16x6xf32> -> vector<6x16xf32>
      %cst_30 = arith.constant dense<0.000000e+00> : vector<6x6xf32>
      %64 = tpu.matmul %63, %4, %cst_30 {dimension_numbers = #tpu.dot_dimension_numbers<[1], [0], [0], [1], [0, 0, 1, 1], [], []>} : vector<6x16xf32>, vector<16x6xf32>, vector<6x6xf32> -> vector<6x6xf32>
      %65 = arith.mulf %54, %54 : vector<16x16xf32>
      %cst_31 = arith.constant dense<0.000000e+00> : vector<16x6xf32>
      %66 = tpu.matmul %65, %3, %cst_31 {dimension_numbers = #tpu.dot_dimension_numbers<[1], [0], [0], [1], [0, 0, 1, 1], [], []>} : vector<16x16xf32>, vector<16x6xf32>, vector<16x6xf32> -> vector<16x6xf32>
      %67 = tpu.transpose %66, [1, 0] : vector<16x6xf32> -> vector<6x16xf32>
      %cst_32 = arith.constant dense<0.000000e+00> : vector<6x6xf32>
      %68 = tpu.matmul %67, %4, %cst_32 {dimension_numbers = #tpu.dot_dimension_numbers<[1], [0], [0], [1], [0, 0, 1, 1], [], []>} : vector<6x16xf32>, vector<16x6xf32>, vector<6x6xf32> -> vector<6x6xf32>
      %69 = arith.mulf %50, %54 : vector<16x16xf32>
      %cst_33 = arith.constant dense<0.000000e+00> : vector<16x6xf32>
      %70 = tpu.matmul %69, %3, %cst_33 {dimension_numbers = #tpu.dot_dimension_numbers<[1], [0], [0], [1], [0, 0, 1, 1], [], []>} : vector<16x16xf32>, vector<16x6xf32>, vector<16x6xf32> -> vector<16x6xf32>
      %71 = tpu.transpose %70, [1, 0] : vector<16x6xf32> -> vector<6x16xf32>
      %cst_34 = arith.constant dense<0.000000e+00> : vector<6x6xf32>
      %72 = tpu.matmul %71, %4, %cst_34 {dimension_numbers = #tpu.dot_dimension_numbers<[1], [0], [0], [1], [0, 0, 1, 1], [], []>} : vector<6x16xf32>, vector<16x6xf32>, vector<6x6xf32> -> vector<6x6xf32>
      %73 = arith.mulf %57, %57 : vector<6x6xf32>
      %74 = arith.mulf %60, %60 : vector<6x6xf32>
      %75 = arith.mulf %57, %60 : vector<6x6xf32>
      %76 = arith.subf %64, %73 : vector<6x6xf32>
      %77 = arith.subf %68, %74 : vector<6x6xf32>
      %78 = arith.subf %72, %75 : vector<6x6xf32>
      %cst_35 = arith.constant 2.000000e+00 : f32
      %79 = vector.broadcast %cst_35 : f32 to vector<6x6xf32>
      %80 = arith.mulf %79, %78 : vector<6x6xf32>
      %cst_36 = arith.constant 8.99999984E-4 : f32
      %81 = vector.broadcast %cst_36 : f32 to vector<6x6xf32>
      %82 = arith.addf %80, %81 : vector<6x6xf32>
      %83 = arith.addf %76, %77 : vector<6x6xf32>
      %cst_37 = arith.constant 8.99999984E-4 : f32
      %84 = vector.broadcast %cst_37 : f32 to vector<6x6xf32>
      %85 = arith.addf %83, %84 : vector<6x6xf32>
      %86 = arith.divf %82, %85 : vector<6x6xf32>
      %cst_38 = arith.constant 2.000000e+00 : f32
      %87 = vector.broadcast %cst_38 : f32 to vector<6x6xf32>
      %88 = arith.mulf %87, %75 : vector<6x6xf32>
      %cst_39 = arith.constant 9.99999974E-5 : f32
      %89 = vector.broadcast %cst_39 : f32 to vector<6x6xf32>
      %90 = arith.addf %88, %89 : vector<6x6xf32>
      %91 = arith.addf %73, %74 : vector<6x6xf32>
      %cst_40 = arith.constant 9.99999974E-5 : f32
      %92 = vector.broadcast %cst_40 : f32 to vector<6x6xf32>
      %93 = arith.addf %91, %92 : vector<6x6xf32>
      %94 = arith.divf %90, %93 : vector<6x6xf32>
      %95 = arith.mulf %94, %86 : vector<6x6xf32>
      %96 = vector.shape_cast %95 : vector<6x6xf32> to vector<1x6x6xf32>
      %cst_41 = arith.constant dense<0.000000e+00> : vector<1xf32>
      %97 = vector.multi_reduction <add>, %96, %cst_41 [1, 2] : vector<1x6x6xf32> to vector<1xf32>
      %98 = vector.shape_cast %97 : vector<1xf32> to vector<1x1x1xf32>
      %99 = vector.extract %98[0, 0, 0] : f32 from vector<1x1x1xf32>
      %100 = arith.addf %arg9, %99 : f32
      scf.yield %40, %46, %100 : f32, f32, f32
    }
    %8 = tpu.iota {dimensions = array<i32: 1>} : vector<8x128xi32>
    %c0_i32_7 = arith.constant 0 : i32
    %9 = vector.broadcast %c0_i32_7 : i32 to vector<8x128xi32>
    %10 = arith.cmpi eq, %8, %9 : vector<8x128xi32>
    %cst_8 = arith.constant 0.000000e+00 : f32
    %11 = vector.broadcast %7#0 : f32 to vector<8x128xf32>
    %12 = vector.broadcast %cst_8 : f32 to vector<8x128xf32>
    %13 = arith.select %10, %11, %12 : vector<8x128xi1>, vector<8x128xf32>
    %c1_i32_9 = arith.constant 1 : i32
    %14 = vector.broadcast %c1_i32_9 : i32 to vector<8x128xi32>
    %15 = arith.cmpi eq, %8, %14 : vector<8x128xi32>
    %cst_10 = arith.constant 0.000000e+00 : f32
    %16 = vector.broadcast %7#1 : f32 to vector<8x128xf32>
    %17 = vector.broadcast %cst_10 : f32 to vector<8x128xf32>
    %18 = arith.select %15, %16, %17 : vector<8x128xi1>, vector<8x128xf32>
    %19 = arith.addf %13, %18 : vector<8x128xf32>
    %c2_i32 = arith.constant 2 : i32
    %20 = vector.broadcast %c2_i32 : i32 to vector<8x128xi32>
    %21 = arith.cmpi eq, %8, %20 : vector<8x128xi32>
    %cst_11 = arith.constant 0.000000e+00 : f32
    %22 = vector.broadcast %7#2 : f32 to vector<8x128xf32>
    %23 = vector.broadcast %cst_11 : f32 to vector<8x128xf32>
    %24 = arith.select %21, %22, %23 : vector<8x128xi1>, vector<8x128xf32>
    %25 = arith.addf %19, %24 : vector<8x128xf32>
    %26 = vector.shape_cast %25 : vector<8x128xf32> to vector<1x8x128xf32>
    %c0_12 = arith.constant 0 : index
    %c0_13 = arith.constant 0 : index
    %c0_14 = arith.constant 0 : index
    %27 = vector.load %arg5[%c0_12, %c0_13, %c0_14] : memref<1x8x128xf32, #tpu.memory_space<vmem>>, vector<1x8x128xf32>
    tpu.vector_store %arg5[%c0_12, %c0_13, %c0_14], %26 {strides = array<i32>} : memref<1x8x128xf32, #tpu.memory_space<vmem>>, vector<1x8x128xf32>,
    return
  }
  func.func @transform_0(%arg0: i32) -> (i32, i32, i32) {
    %c0_i32 = arith.constant 0 : i32
    %c0_i32_0 = arith.constant 0 : i32
    %c0_i32_1 = arith.constant 0 : i32
    return %arg0, %c0_i32, %c0_i32_0 : i32, i32, i32
  }
  func.func @transform_1(%arg0: i32) -> (i32, i32, i32) {
    %c0_i32 = arith.constant 0 : i32
    %c0_i32_0 = arith.constant 0 : i32
    %c0_i32_1 = arith.constant 0 : i32
    return %arg0, %c0_i32, %c0_i32_0 : i32, i32, i32
  }
  func.func @transform_2(%arg0: i32) -> (i32, i32) {
    %c0_i32 = arith.constant 0 : i32
    %c0_i32_0 = arith.constant 0 : i32
    %c0_i32_1 = arith.constant 0 : i32
    return %c0_i32, %c0_i32_0 : i32, i32
  }
  func.func @transform_3(%arg0: i32) -> (i32, i32) {
    %c0_i32 = arith.constant 0 : i32
    %c0_i32_0 = arith.constant 0 : i32
    %c0_i32_1 = arith.constant 0 : i32
    return %c0_i32, %c0_i32_0 : i32, i32
  }
  func.func @transform_4(%arg0: i32) -> (i32, i32, i32) {
    %c0_i32 = arith.constant 0 : i32
    %c0_i32_0 = arith.constant 0 : i32
    %c0_i32_1 = arith.constant 0 : i32
    return %arg0, %c0_i32, %c0_i32_0 : i32, i32, i32
  }
}

</mosaic_0001>

<llo_original>
// kernel: tpu_custom_call.1
$region0: #{tpu_custom_call.1}
  #allocation0 [shape = 'u32[]', space=smem, size = 0x4, offset = 0x4, fixed_abs, tag = 'smem constant byte address 0x4 - core index']
  #allocation1 [shape = 'u32[144,128]{1,0:T(1,128)}', space=vmem, size = 0x12000, scoped, tag = 'internal scratch']
  %s0 = inlined_call_operand.hbm [shape: f32[8,16,16], index: 0, kind: input, shape index: {}]
  %s1 = inlined_call_operand.hbm [shape: f32[8,16,16], index: 1, kind: input, shape index: {}]
  %s2 = inlined_call_operand.vmem [shape: f32[16,6], index: 2, kind: input, shape index: {}]
  %s3 = inlined_call_operand.vmem [shape: f32[16,6], index: 3, kind: input, shape index: {}]
  %s4 = inlined_call_operand.hbm [shape: f32[1,8,128], index: 4, kind: output, shape index: {}]
  %s5 = sld [smem:[#allocation0]]
  $region41: #{tpu_custom_call.1} parent=0
    _
  %s7 = ssub.s32 1, %s5
  %s8 = scalar_select 0, %s7, %s5
  $region1: #{tpu_custom_call.1} parent=0
    #allocation2 [shape = 'u8[65536]{0}', space=vmem, size = 0x10000, scoped, tag = 'input window, operand 0, single buffered']
    #allocation3 [shape = 's32[1]{0}', space=sflag, size = 0x4, scoped, tag = 'scoped memory for tpu_custom_call.1']
    #allocation4 [shape = 's32[1]{0}', space=sflag, size = 0x4, scoped, tag = 'scoped memory for tpu_custom_call.1']
    #allocation5 [shape = 'u8[65536]{0}', space=vmem, size = 0x10000, scoped, tag = 'input window, operand 1, single buffered']
    #allocation6 [shape = 's32[1]{0}', space=sflag, size = 0x4, scoped, tag = 'scoped memory for tpu_custom_call.1']
    #allocation7 [shape = 'u8[4096]{0}', space=vmem, size = 0x1000, scoped, tag = 'output window, operand 0, single buffered']
    %9 = vsyncpa [#allocation3], 0
    %10 = vsyncpa [#allocation6], 0
    %11 = vsyncpa [#allocation4], 0
    // Predicated region
    $region2: #{tpu_custom_call.1} parent=1 // pred_check
      _
    $region3: #{tpu_custom_call.1} parent=1 // pred_check_branch
      %13 = sbr.rel (0) target = $region5
    $region4: #{tpu_custom_call.1} parent=1 // pred_region
      %s15 = ssub.s32 2048, 2048
      %16 = vsyncadd [#allocation3], %s15
      %s17 = sshll.u32 [#allocation2], 4
      %s18 = int_to_ptr.vmem [resolvable:$true] %s17
      %23 = dma.hbm_to_vmem [thread:$0]  %s0, 2048, %s18, [#allocation3], 128, 128, 8
    $region5: #{tpu_custom_call.1} parent=1 // pred_fallthru
      _
    // Predicated region
    $region6: #{tpu_custom_call.1} parent=1 // pred_check
      _
    $region7: #{tpu_custom_call.1} parent=1 // pred_check_branch
      %25 = sbr.rel (0) target = $region9
    $region8: #{tpu_custom_call.1} parent=1 // pred_region
      %s27 = ssub.s32 2048, 2048
      %28 = vsyncadd [#allocation6], %s27
      %s29 = sshll.u32 [#allocation5], 4
      %s30 = int_to_ptr.vmem [resolvable:$true] %s29
      %35 = dma.hbm_to_vmem [thread:$0]  %s1, 2048, %s30, [#allocation6], 128, 128, 8
    $region9: #{tpu_custom_call.1} parent=1 // pred_fallthru
      _
    // Predicated region
    $region10: #{tpu_custom_call.1} parent=1 // pred_check
      _
    $region11: #{tpu_custom_call.1} parent=1 // pred_check_branch
      %37 = sbr.rel (0) target = $region13
    $region12: #{tpu_custom_call.1} parent=1 // pred_region
      _
    $region13: #{tpu_custom_call.1} parent=1 // pred_fallthru
      _
    // Predicated region
    $region14: #{tpu_custom_call.1} parent=1 // pred_check
      _
    $region15: #{tpu_custom_call.1} parent=1 // pred_check_branch
      %39 = sbr.rel (0) target = $region17
    $region16: #{tpu_custom_call.1} parent=1 // pred_region
      _
    $region17: #{tpu_custom_call.1} parent=1 // pred_fallthru
      _
    // Predicated region
    $region18: #{tpu_custom_call.1} parent=1 // pred_check
      _
    $region19: #{tpu_custom_call.1} parent=1 // pred_check_branch
      %41 = sbr.rel (0) target = $region21
    $region20: #{tpu_custom_call.1} parent=1 // pred_region
      %42 = dma.done [#allocation3], 2048
    $region21: #{tpu_custom_call.1} parent=1 // pred_fallthru
      _
    // Predicated region
    $region22: #{tpu_custom_call.1} parent=1 // pred_check
      _
    $region23: #{tpu_custom_call.1} parent=1 // pred_check_branch
      %44 = sbr.rel (0) target = $region25
    $region24: #{tpu_custom_call.1} parent=1 // pred_region
      %45 = dma.done [#allocation6], 2048
    $region25: #{tpu_custom_call.1} parent=1 // pred_fallthru
      _
    %s46 = smul.u32 0, 8
    %s47 = ssub.s32 8, %s46
    %p48 = scmp.lt.s32.totalorder %s47, 8
    %s49 = scalar_select %p48, %s47, 8
    %v50 = vld [vmem:[%s2] sm:$0xff]
    %v51 = vld [vmem:[%s2 + $0x8] sm:$0xff]
    %v52 = vld [vmem:[%s3] sm:$0xff]
    %v53 = vld [vmem:[%s3 + $0x8] sm:$0xff]
    // While loop
    $region26: #{tpu_custom_call.1} parent=1 // loop_pre_header
      _
    $region27: #{tpu_custom_call.1} parent=1 // loop_header
      %s55 = sphi 0, %s57
      %p56 = scmp.ge.s32.totalorder %s55, %s49
      %s60 = sphi 0.0, %s87
      %s61 = sphi 0.0, %s102
      %s62 = sphi 0.0, %s1077
    $region28: #{tpu_custom_call.1} parent=1 // loop_header_branch
      %59 = sbr.rel (%p56) target = $region32
    $region29: #{tpu_custom_call.1} parent=1 // loop_body
      %s63 = smul.u32 %s55, 16
      %s64 = scalar_lea.vmem [#allocation2], %s63
      %v65 = vld [vmem:[%s64] sm:$0xff]
      %v66 = vld [vmem:[%s64 + $0x8] sm:$0xff]
      %s67 = scalar_lea.vmem [#allocation5], %s63
      %v68 = vld [vmem:[%s67] sm:$0xff]
      %v69 = vld [vmem:[%s67 + $0x8] sm:$0xff]
      %v70 = vsub.f32 %v65, %v68
      %v71 = vsub.f32 %v66, %v69
      %v72 = vmul.f32 %v70, %v70
      %v73 = vmul.f32 %v71, %v71
      %vm74 = vcmask 130048
      %v75 = vsel %vm74, %v72, 0.0
      %v76 = vsel %vm74, %v73, 0.0
      %v77 = vadd.f32 %v75, %v76
      %78 = vadd.xlane.f32.xlu0 %v77
      %v79 = vpop.xlane.xlu0 %78
      %v80 = vrot.slane %v79, 4
      %v81 = vadd.f32 %v79, %v80
      %v82 = vrot.slane %v81, 2
      %v83 = vadd.f32 %v81, %v82
      %v84 = vrot.slane %v83, 1
      %v85 = vadd.f32 %v83, %v84
      %s86 = vtos %v85
      %s87 = sadd.f32 %s60, %s86
      %v88 = vand.u32 2147483647, %v70
      %v89 = vand.u32 2147483647, %v71
      %v90 = vsel %vm74, %v88, 0.0
      %v91 = vsel %vm74, %v89, 0.0
      %v92 = vadd.f32 %v90, %v91
      %93 = vadd.xlane.f32.xlu0 %v92
      %v94 = vpop.xlane.xlu0 %93
      %v95 = vrot.slane %v94, 4
      %v96 = vadd.f32 %v94, %v95
      %v97 = vrot.slane %v96, 2
      %v98 = vadd.f32 %v96, %v97
      %v99 = vrot.slane %v98, 1
      %v100 = vadd.f32 %v98, %v99
      %s101 = vtos %v100
      %s102 = sadd.f32 %s61, %s101
      %v103 = vadd.f32 %v65, 1.0
      %v104 = vadd.f32 %v66, 1.0
      %v105 = vmul.f32 %v103, 0.5
      %v106 = vmul.f32 %v104, 0.5
      %v107 = vadd.f32 %v68, 1.0
      %v108 = vadd.f32 %v69, 1.0
      %v109 = vmul.f32 %v107, 0.5
      %v110 = vmul.f32 %v108, 0.5
      %v112 = vsel %vm74, %v105, 0
      %v115 = vsel %vm74, %v106, 0
      %117 = vmatprep.subr.mxu0 0.0
      %118 = vmatpush1.msra.mxu0 %v50
      %119 = vmatprep.subr.mxu0 0.0
      %120 = vmatpush1.msra.mxu0 %v51
      %121 = vmatprep.subr.mxu0 0.0
      %122 = vmatpush1.msra.mxu0 0.0
      %123 = vmatprep.subr.mxu0 0.0
      %124 = vmatpush1.msra.mxu0 0.0
      %125 = vmatprep.subr.mxu0 0.0
      %126 = vmatpush1.msra.mxu0 0.0
      %127 = vmatprep.subr.mxu0 0.0
      %128 = vmatpush1.msra.mxu0 0.0
      %129 = vmatprep.subr.mxu0 0.0
      %130 = vmatpush1.msra.mxu0 0.0
      %131 = vmatprep.subr.mxu0 0.0
      %132 = vmatpush1.msra.mxu0 0.0
      %133 = vmatprep.subr.mxu0 0.0
      %134 = vmatpush1.msra.mxu0 0.0
      %135 = vmatprep.subr.mxu0 0.0
      %136 = vmatpush1.msra.mxu0 0.0
      %137 = vmatprep.subr.mxu0 0.0
      %138 = vmatpush1.msra.mxu0 0.0
      %139 = vmatprep.subr.mxu0 0.0
      %140 = vmatpush1.msra.mxu0 0.0
      %141 = vmatprep.subr.mxu0 0.0
      %142 = vmatpush1.msra.mxu0 0.0
      %143 = vmatprep.subr.mxu0 0.0
      %144 = vmatpush1.msra.mxu0 0.0
      %145 = vmatprep.subr.mxu0 0.0
      %146 = vmatpush1.msra.mxu0 0.0
      %147 = vmatprep.subr.mxu0 0.0
      %148 = vmatpush1.msra.mxu0 0.0
      %149 = vmatprep.subr.mxu0 0.0
      %150 = vmatpush1.msra.mxu0 0.0
      %151 = vmatprep.subr.mxu0 0.0
      %152 = vmatpush1.msra.mxu0 0.0
      %153 = vmatprep.subr.mxu0 0.0
      %154 = vmatpush1.msra.mxu0 0.0
      %155 = vmatprep.subr.mxu0 0.0
      %156 = vmatpush1.msra.mxu0 0.0
      %157 = vmatprep.subr.mxu0 0.0
      %158 = vmatpush1.msra.mxu0 0.0
      %159 = vmatprep.subr.mxu0 0.0
      %160 = vmatpush1.msra.mxu0 0.0
      %161 = vmatprep.subr.mxu0 0.0
      %162 = vmatpush1.msra.mxu0 0.0
      %163 = vmatprep.subr.mxu0 0.0
      %164 = vmatpush1.msra.mxu0 0.0
      %165 = vmatprep.subr.mxu0 0.0
      %166 = vmatpush1.msra.mxu0 0.0
      %167 = vmatprep.subr.mxu0 0.0
      %168 = vmatpush1.msra.mxu0 0.0
      %169 = vmatprep.subr.mxu0 0.0
      %170 = vmatpush1.msra.mxu0 0.0
      %171 = vmatprep.subr.mxu0 0.0
      %172 = vmatpush1.msra.mxu0 0.0
      %173 = vmatprep.subr.mxu0 0.0
      %174 = vmatpush1.msra.mxu0 0.0
      %175 = vmatprep.subr.mxu0 0.0
      %176 = vmatpush1.msra.mxu0 0.0
      %177 = vmatprep.subr.mxu0 0.0
      %178 = vmatpush1.msra.mxu0 0.0
      %179 = vmatprep.subr.mxu0 0.0
      %180 = vmatpush1.msra.mxu0 0.0
      %181 = vmatprep.mubr.f32.mxu0 0.0
      %182 = vmatmul.mubr.f32.gmra.mrb[0].mxu0 %v112
      %v183 = vpop.f32.mrb[0].mxu0
      %v184 = vadd.f32 0.0, %v183
      %v185 = vpop.f32.mrb[0].mxu0
      %186 = vmatprep.mubr.f32.mxu0 0.0
      %187 = vmatmul.mubr.f32.gmra.mrb[0].mxu0 %v115
      %v188 = vpop.f32.mrb[0].mxu0
      %v189 = vadd.f32 0.0, %v188
      %v190 = vpop.f32.mrb[0].mxu0
      %191 = vdwg.mxu0
      %192 = vxpose.xlu0.b32.start [1/16] %v184, 128
      %193 = vxpose.xlu0.b32.cont [2/16] %v189, 128
      %194 = vxpose.xlu0.b32.cont [3/16] 0.0, 128
      %195 = vxpose.xlu0.b32.cont [4/16] 0.0, 128
      %196 = vxpose.xlu0.b32.cont [5/16] 0.0, 128
      %197 = vxpose.xlu0.b32.cont [6/16] 0.0, 128
      %198 = vxpose.xlu0.b32.cont [7/16] 0.0, 128
      %199 = vxpose.xlu0.b32.cont [8/16] 0.0, 128
      %200 = vxpose.xlu0.b32.cont [9/16] 0.0, 128
      %201 = vxpose.xlu0.b32.cont [10/16] 0.0, 128
      %202 = vxpose.xlu0.b32.cont [11/16] 0.0, 128
      %203 = vxpose.xlu0.b32.cont [12/16] 0.0, 128
      %204 = vxpose.xlu0.b32.cont [13/16] 0.0, 128
      %205 = vxpose.xlu0.b32.cont [14/16] 0.0, 128
      %206 = vxpose.xlu0.b32.cont [15/16] 0.0, 128
      %207 = vxpose.xlu0.b32.end [16/16] 0.0, 128
      %v208 = vpop.trf.xlu0
      %v209 = vpop.trf.xlu0
      %v210 = vpop.trf.xlu0
      %v211 = vpop.trf.xlu0
      %v212 = vpop.trf.xlu0
      %v213 = vpop.trf.xlu0
      %v214 = vpop.trf.xlu0
      %v215 = vpop.trf.xlu0
      %v216 = vpop.trf.xlu0
      %v217 = vpop.trf.xlu0
      %v218 = vpop.trf.xlu0
      %v219 = vpop.trf.xlu0
      %v220 = vpop.trf.xlu0
      %v221 = vpop.trf.xlu0
      %v222 = vpop.trf.xlu0
      %v223 = vpop.trf.xlu0
      %v225 = vsel %vm74, %v208, 0
      %227 = vmatprep.subr.mxu0 0.0
      %228 = vmatpush1.msra.mxu0 %v52
      %229 = vmatprep.subr.mxu0 0.0
      %230 = vmatpush1.msra.mxu0 %v53
      %231 = vmatprep.subr.mxu0 0.0
      %232 = vmatpush1.msra.mxu0 0.0
      %233 = vmatprep.subr.mxu0 0.0
      %234 = vmatpush1.msra.mxu0 0.0
      %235 = vmatprep.subr.mxu0 0.0
      %236 = vmatpush1.msra.mxu0 0.0
      %237 = vmatprep.subr.mxu0 0.0
      %238 = vmatpush1.msra.mxu0 0.0
      %239 = vmatprep.subr.mxu0 0.0
      %240 = vmatpush1.msra.mxu0 0.0
      %241 = vmatprep.subr.mxu0 0.0
      %242 = vmatpush1.msra.mxu0 0.0
      %243 = vmatprep.subr.mxu0 0.0
      %244 = vmatpush1.msra.mxu0 0.0
      %245 = vmatprep.subr.mxu0 0.0
      %246 = vmatpush1.msra.mxu0 0.0
      %247 = vmatprep.subr.mxu0 0.0
      %248 = vmatpush1.msra.mxu0 0.0
      %249 = vmatprep.subr.mxu0 0.0
      %250 = vmatpush1.msra.mxu0 0.0
      %251 = vmatprep.subr.mxu0 0.0
      %252 = vmatpush1.msra.mxu0 0.0
      %253 = vmatprep.subr.mxu0 0.0
      %254 = vmatpush1.msra.mxu0 0.0
      %255 = vmatprep.subr.mxu0 0.0
      %256 = vmatpush1.msra.mxu0 0.0
      %257 = vmatprep.subr.mxu0 0.0
      %258 = vmatpush1.msra.mxu0 0.0
      %259 = vmatprep.subr.mxu0 0.0
      %260 = vmatpush1.msra.mxu0 0.0
      %261 = vmatprep.subr.mxu0 0.0
      %262 = vmatpush1.msra.mxu0 0.0
      %263 = vmatprep.subr.mxu0 0.0
      %264 = vmatpush1.msra.mxu0 0.0
      %265 = vmatprep.subr.mxu0 0.0
      %266 = vmatpush1.msra.mxu0 0.0
      %267 = vmatprep.subr.mxu0 0.0
      %268 = vmatpush1.msra.mxu0 0.0
      %269 = vmatprep.subr.mxu0 0.0
      %270 = vmatpush1.msra.mxu0 0.0
      %271 = vmatprep.subr.mxu0 0.0
      %272 = vmatpush1.msra.mxu0 0.0
      %273 = vmatprep.subr.mxu0 0.0
      %274 = vmatpush1.msra.mxu0 0.0
      %275 = vmatprep.subr.mxu0 0.0
      %276 = vmatpush1.msra.mxu0 0.0
      %277 = vmatprep.subr.mxu0 0.0
      %278 = vmatpush1.msra.mxu0 0.0
      %279 = vmatprep.subr.mxu0 0.0
      %280 = vmatpush1.msra.mxu0 0.0
      %281 = vmatprep.subr.mxu0 0.0
      %282 = vmatpush1.msra.mxu0 0.0
      %283 = vmatprep.subr.mxu0 0.0
      %284 = vmatpush1.msra.mxu0 0.0
      %285 = vmatprep.subr.mxu0 0.0
      %286 = vmatpush1.msra.mxu0 0.0
      %287 = vmatprep.subr.mxu0 0.0
      %288 = vmatpush1.msra.mxu0 0.0
      %289 = vmatprep.subr.mxu0 0.0
      %290 = vmatpush1.msra.mxu0 0.0
      %291 = vmatprep.mubr.f32.mxu0 0.0
      %292 = vmatmul.mubr.f32.gmra.mrb[0].mxu0 %v225
      %v293 = vpop.f32.mrb[0].mxu0
      %v294 = vadd.f32 0.0, %v293
      %v295 = vpop.f32.mrb[0].mxu0
      %296 = vdwg.mxu0
      %v298 = vsel %vm74, %v109, 0
      %v301 = vsel %vm74, %v110, 0
      %303 = vmatprep.subr.mxu0 0.0
      %304 = vmatpush1.msra.mxu0 %v50
      %305 = vmatprep.subr.mxu0 0.0
      %306 = vmatpush1.msra.mxu0 %v51
      %307 = vmatprep.subr.mxu0 0.0
      %308 = vmatpush1.msra.mxu0 0.0
      %309 = vmatprep.subr.mxu0 0.0
      %310 = vmatpush1.msra.mxu0 0.0
      %311 = vmatprep.subr.mxu0 0.0
      %312 = vmatpush1.msra.mxu0 0.0
      %313 = vmatprep.subr.mxu0 0.0
      %314 = vmatpush1.msra.mxu0 0.0
      %315 = vmatprep.subr.mxu0 0.0
      %316 = vmatpush1.msra.mxu0 0.0
      %317 = vmatprep.subr.mxu0 0.0
      %318 = vmatpush1.msra.mxu0 0.0
      %319 = vmatprep.subr.mxu0 0.0
      %320 = vmatpush1.msra.mxu0 0.0
      %321 = vmatprep.subr.mxu0 0.0
      %322 = vmatpush1.msra.mxu0 0.0
      %323 = vmatprep.subr.mxu0 0.0
      %324 = vmatpush1.msra.mxu0 0.0
      %325 = vmatprep.subr.mxu0 0.0
      %326 = vmatpush1.msra.mxu0 0.0
      %327 = vmatprep.subr.mxu0 0.0
      %328 = vmatpush1.msra.mxu0 0.0
      %329 = vmatprep.subr.mxu0 0.0
      %330 = vmatpush1.msra.mxu0 0.0
      %331 = vmatprep.subr.mxu0 0.0
      %332 = vmatpush1.msra.mxu0 0.0
      %333 = vmatprep.subr.mxu0 0.0
      %334 = vmatpush1.msra.mxu0 0.0
      %335 = vmatprep.subr.mxu0 0.0
      %336 = vmatpush1.msra.mxu0 0.0
      %337 = vmatprep.subr.mxu0 0.0
      %338 = vmatpush1.msra.mxu0 0.0
      %339 = vmatprep.subr.mxu0 0.0
      %340 = vmatpush1.msra.mxu0 0.0
      %341 = vmatprep.subr.mxu0 0.0
      %342 = vmatpush1.msra.mxu0 0.0
      %343 = vmatprep.subr.mxu0 0.0
      %344 = vmatpush1.msra.mxu0 0.0
      %345 = vmatprep.subr.mxu0 0.0
      %346 = vmatpush1.msra.mxu0 0.0
      %347 = vmatprep.subr.mxu0 0.0
      %348 = vmatpush1.msra.mxu0 0.0
      %349 = vmatprep.subr.mxu0 0.0
      %350 = vmatpush1.msra.mxu0 0.0
      %351 = vmatprep.subr.mxu0 0.0
      %352 = vmatpush1.msra.mxu0 0.0
      %353 = vmatprep.subr.mxu0 0.0
      %354 = vmatpush1.msra.mxu0 0.0
      %355 = vmatprep.subr.mxu0 0.0
      %356 = vmatpush1.msra.mxu0 0.0
      %357 = vmatprep.subr.mxu0 0.0
      %358 = vmatpush1.msra.mxu0 0.0
      %359 = vmatprep.subr.mxu0 0.0
      %360 = vmatpush1.msra.mxu0 0.0
      %361 = vmatprep.subr.mxu0 0.0
      %362 = vmatpush1.msra.mxu0 0.0
      %363 = vmatprep.subr.mxu0 0.0
      %364 = vmatpush1.msra.mxu0 0.0
      %365 = vmatprep.subr.mxu0 0.0
      %366 = vmatpush1.msra.mxu0 0.0
      %367 = vmatprep.mubr.f32.mxu0 0.0
      %368 = vmatmul.mubr.f32.gmra.mrb[0].mxu0 %v298
      %v369 = vpop.f32.mrb[0].mxu0
      %v370 = vadd.f32 0.0, %v369
      %v371 = vpop.f32.mrb[0].mxu0
      %372 = vmatprep.mubr.f32.mxu0 0.0
      %373 = vmatmul.mubr.f32.gmra.mrb[0].mxu0 %v301
      %v374 = vpop.f32.mrb[0].mxu0
      %v375 = vadd.f32 0.0, %v374
      %v376 = vpop.f32.mrb[0].mxu0
      %377 = vdwg.mxu0
      %378 = vxpose.xlu0.b32.start [1/16] %v370, 128
      %379 = vxpose.xlu0.b32.cont [2/16] %v375, 128
      %380 = vxpose.xlu0.b32.cont [3/16] 0.0, 128
      %381 = vxpose.xlu0.b32.cont [4/16] 0.0, 128
      %382 = vxpose.xlu0.b32.cont [5/16] 0.0, 128
      %383 = vxpose.xlu0.b32.cont [6/16] 0.0, 128
      %384 = vxpose.xlu0.b32.cont [7/16] 0.0, 128
      %385 = vxpose.xlu0.b32.cont [8/16] 0.0, 128
      %386 = vxpose.xlu0.b32.cont [9/16] 0.0, 128
      %387 = vxpose.xlu0.b32.cont [10/16] 0.0, 128
      %388 = vxpose.xlu0.b32.cont [11/16] 0.0, 128
      %389 = vxpose.xlu0.b32.cont [12/16] 0.0, 128
      %390 = vxpose.xlu0.b32.cont [13/16] 0.0, 128
      %391 = vxpose.xlu0.b32.cont [14/16] 0.0, 128
      %392 = vxpose.xlu0.b32.cont [15/16] 0.0, 128
      %393 = vxpose.xlu0.b32.end [16/16] 0.0, 128
      %v394 = vpop.trf.xlu0
      %v395 = vpop.trf.xlu0
      %v396 = vpop.trf.xlu0
      %v397 = vpop.trf.xlu0
      %v398 = vpop.trf.xlu0
      %v399 = vpop.trf.xlu0
      %v400 = vpop.trf.xlu0
      %v401 = vpop.trf.xlu0
      %v402 = vpop.trf.xlu0
      %v403 = vpop.trf.xlu0
      %v404 = vpop.trf.xlu0
      %v405 = vpop.trf.xlu0
      %v406 = vpop.trf.xlu0
      %v407 = vpop.trf.xlu0
      %v408 = vpop.trf.xlu0
      %v409 = vpop.trf.xlu0
      %v411 = vsel %vm74, %v394, 0
      %413 = vmatprep.subr.mxu0 0.0
      %414 = vmatpush1.msra.mxu0 %v52
      %415 = vmatprep.subr.mxu0 0.0
      %416 = vmatpush1.msra.mxu0 %v53
      %417 = vmatprep.subr.mxu0 0.0
      %418 = vmatpush1.msra.mxu0 0.0
      %419 = vmatprep.subr.mxu0 0.0
      %420 = vmatpush1.msra.mxu0 0.0
      %421 = vmatprep.subr.mxu0 0.0
      %422 = vmatpush1.msra.mxu0 0.0
      %423 = vmatprep.subr.mxu0 0.0
      %424 = vmatpush1.msra.mxu0 0.0
      %425 = vmatprep.subr.mxu0 0.0
      %426 = vmatpush1.msra.mxu0 0.0
      %427 = vmatprep.subr.mxu0 0.0
      %428 = vmatpush1.msra.mxu0 0.0
      %429 = vmatprep.subr.mxu0 0.0
      %430 = vmatpush1.msra.mxu0 0.0
      %431 = vmatprep.subr.mxu0 0.0
      %432 = vmatpush1.msra.mxu0 0.0
      %433 = vmatprep.subr.mxu0 0.0
      %434 = vmatpush1.msra.mxu0 0.0
      %435 = vmatprep.subr.mxu0 0.0
      %436 = vmatpush1.msra.mxu0 0.0
      %437 = vmatprep.subr.mxu0 0.0
      %438 = vmatpush1.msra.mxu0 0.0
      %439 = vmatprep.subr.mxu0 0.0
      %440 = vmatpush1.msra.mxu0 0.0
      %441 = vmatprep.subr.mxu0 0.0
      %442 = vmatpush1.msra.mxu0 0.0
      %443 = vmatprep.subr.mxu0 0.0
      %444 = vmatpush1.msra.mxu0 0.0
      %445 = vmatprep.subr.mxu0 0.0
      %446 = vmatpush1.msra.mxu0 0.0
      %447 = vmatprep.subr.mxu0 0.0
      %448 = vmatpush1.msra.mxu0 0.0
      %449 = vmatprep.subr.mxu0 0.0
      %450 = vmatpush1.msra.mxu0 0.0
      %451 = vmatprep.subr.mxu0 0.0
      %452 = vmatpush1.msra.mxu0 0.0
      %453 = vmatprep.subr.mxu0 0.0
      %454 = vmatpush1.msra.mxu0 0.0
      %455 = vmatprep.subr.mxu0 0.0
      %456 = vmatpush1.msra.mxu0 0.0
      %457 = vmatprep.subr.mxu0 0.0
      %458 = vmatpush1.msra.mxu0 0.0
      %459 = vmatprep.subr.mxu0 0.0
      %460 = vmatpush1.msra.mxu0 0.0
      %461 = vmatprep.subr.mxu0 0.0
      %462 = vmatpush1.msra.mxu0 0.0
      %463 = vmatprep.subr.mxu0 0.0
      %464 = vmatpush1.msra.mxu0 0.0
      %465 = vmatprep.subr.mxu0 0.0
      %466 = vmatpush1.msra.mxu0 0.0
      %467 = vmatprep.subr.mxu0 0.0
      %468 = vmatpush1.msra.mxu0 0.0
      %469 = vmatprep.subr.mxu0 0.0
      %470 = vmatpush1.msra.mxu0 0.0
      %471 = vmatprep.subr.mxu0 0.0
      %472 = vmatpush1.msra.mxu0 0.0
      %473 = vmatprep.subr.mxu0 0.0
      %474 = vmatpush1.msra.mxu0 0.0
      %475 = vmatprep.subr.mxu0 0.0
      %476 = vmatpush1.msra.mxu0 0.0
      %477 = vmatprep.mubr.f32.mxu0 0.0
      %478 = vmatmul.mubr.f32.gmra.mrb[0].mxu0 %v411
      %v479 = vpop.f32.mrb[0].mxu0
      %v480 = vadd.f32 0.0, %v479
      %v481 = vpop.f32.mrb[0].mxu0
      %482 = vdwg.mxu0
      %v483 = vmul.f32 %v105, %v105
      %v484 = vmul.f32 %v106, %v106
      %v486 = vsel %vm74, %v483, 0
      %v489 = vsel %vm74, %v484, 0
      %491 = vmatprep.subr.mxu0 0.0
      %492 = vmatpush1.msra.mxu0 %v50
      %493 = vmatprep.subr.mxu0 0.0
      %494 = vmatpush1.msra.mxu0 %v51
      %495 = vmatprep.subr.mxu0 0.0
      %496 = vmatpush1.msra.mxu0 0.0
      %497 = vmatprep.subr.mxu0 0.0
      %498 = vmatpush1.msra.mxu0 0.0
      %499 = vmatprep.subr.mxu0 0.0
      %500 = vmatpush1.msra.mxu0 0.0
      %501 = vmatprep.subr.mxu0 0.0
      %502 = vmatpush1.msra.mxu0 0.0
      %503 = vmatprep.subr.mxu0 0.0
      %504 = vmatpush1.msra.mxu0 0.0
      %505 = vmatprep.subr.mxu0 0.0
      %506 = vmatpush1.msra.mxu0 0.0
      %507 = vmatprep.subr.mxu0 0.0
      %508 = vmatpush1.msra.mxu0 0.0
      %509 = vmatprep.subr.mxu0 0.0
      %510 = vmatpush1.msra.mxu0 0.0
      %511 = vmatprep.subr.mxu0 0.0
      %512 = vmatpush1.msra.mxu0 0.0
      %513 = vmatprep.subr.mxu0 0.0
      %514 = vmatpush1.msra.mxu0 0.0
      %515 = vmatprep.subr.mxu0 0.0
      %516 = vmatpush1.msra.mxu0 0.0
      %517 = vmatprep.subr.mxu0 0.0
      %518 = vmatpush1.msra.mxu0 0.0
      %519 = vmatprep.subr.mxu0 0.0
      %520 = vmatpush1.msra.mxu0 0.0
      %521 = vmatprep.subr.mxu0 0.0
      %522 = vmatpush1.msra.mxu0 0.0
      %523 = vmatprep.subr.mxu0 0.0
      %524 = vmatpush1.msra.mxu0 0.0
      %525 = vmatprep.subr.mxu0 0.0
      %526 = vmatpush1.msra.mxu0 0.0
      %527 = vmatprep.subr.mxu0 0.0
      %528 = vmatpush1.msra.mxu0 0.0
      %529 = vmatprep.subr.mxu0 0.0
      %530 = vmatpush1.msra.mxu0 0.0
      %531 = vmatprep.subr.mxu0 0.0
      %532 = vmatpush1.msra.mxu0 0.0
      %533 = vmatprep.subr.mxu0 0.0
      %534 = vmatpush1.msra.mxu0 0.0
      %535 = vmatprep.subr.mxu0 0.0
      %536 = vmatpush1.msra.mxu0 0.0
      %537 = vmatprep.subr.mxu0 0.0
      %538 = vmatpush1.msra.mxu0 0.0
      %539 = vmatprep.subr.mxu0 0.0
      %540 = vmatpush1.msra.mxu0 0.0
      %541 = vmatprep.subr.mxu0 0.0
      %542 = vmatpush1.msra.mxu0 0.0
      %543 = vmatprep.subr.mxu0 0.0
      %544 = vmatpush1.msra.mxu0 0.0
      %545 = vmatprep.subr.mxu0 0.0
      %546 = vmatpush1.msra.mxu0 0.0
      %547 = vmatprep.subr.mxu0 0.0
      %548 = vmatpush1.msra.mxu0 0.0
      %549 = vmatprep.subr.mxu0 0.0
      %550 = vmatpush1.msra.mxu0 0.0
      %551 = vmatprep.subr.mxu0 0.0
      %552 = vmatpush1.msra.mxu0 0.0
      %553 = vmatprep.subr.mxu0 0.0
      %554 = vmatpush1.msra.mxu0 0.0
      %555 = vmatprep.mubr.f32.mxu0 0.0
      %556 = vmatmul.mubr.f32.gmra.mrb[0].mxu0 %v486
      %v557 = vpop.f32.mrb[0].mxu0
      %v558 = vadd.f32 0.0, %v557
      %v559 = vpop.f32.mrb[0].mxu0
      %560 = vmatprep.mubr.f32.mxu0 0.0
      %561 = vmatmul.mubr.f32.gmra.mrb[0].mxu0 %v489
      %v562 = vpop.f32.mrb[0].mxu0
      %v563 = vadd.f32 0.0, %v562
      %v564 = vpop.f32.mrb[0].mxu0
      %565 = vdwg.mxu0
      %566 = vxpose.xlu0.b32.start [1/16] %v558, 128
      %567 = vxpose.xlu0.b32.cont [2/16] %v563, 128
      %568 = vxpose.xlu0.b32.cont [3/16] 0.0, 128
      %569 = vxpose.xlu0.b32.cont [4/16] 0.0, 128
      %570 = vxpose.xlu0.b32.cont [5/16] 0.0, 128
      %571 = vxpose.xlu0.b32.cont [6/16] 0.0, 128
      %572 = vxpose.xlu0.b32.cont [7/16] 0.0, 128
      %573 = vxpose.xlu0.b32.cont [8/16] 0.0, 128
      %574 = vxpose.xlu0.b32.cont [9/16] 0.0, 128
      %575 = vxpose.xlu0.b32.cont [10/16] 0.0, 128
      %576 = vxpose.xlu0.b32.cont [11/16] 0.0, 128
      %577 = vxpose.xlu0.b32.cont [12/16] 0.0, 128
      %578 = vxpose.xlu0.b32.cont [13/16] 0.0, 128
      %579 = vxpose.xlu0.b32.cont [14/16] 0.0, 128
      %580 = vxpose.xlu0.b32.cont [15/16] 0.0, 128
      %581 = vxpose.xlu0.b32.end [16/16] 0.0, 128
      %v582 = vpop.trf.xlu0
      %v583 = vpop.trf.xlu0
      %v584 = vpop.trf.xlu0
      %v585 = vpop.trf.xlu0
      %v586 = vpop.trf.xlu0
      %v587 = vpop.trf.xlu0
      %v588 = vpop.trf.xlu0
      %v589 = vpop.trf.xlu0
      %v590 = vpop.trf.xlu0
      %v591 = vpop.trf.xlu0
      %v592 = vpop.trf.xlu0
      %v593 = vpop.trf.xlu0
      %v594 = vpop.trf.xlu0
      %v595 = vpop.trf.xlu0
      %v596 = vpop.trf.xlu0
      %v597 = vpop.trf.xlu0
      %v599 = vsel %vm74, %v582, 0
      %601 = vmatprep.subr.mxu0 0.0
      %602 = vmatpush1.msra.mxu0 %v52
      %603 = vmatprep.subr.mxu0 0.0
      %604 = vmatpush1.msra.mxu0 %v53
      %605 = vmatprep.subr.mxu0 0.0
      %606 = vmatpush1.msra.mxu0 0.0
      %607 = vmatprep.subr.mxu0 0.0
      %608 = vmatpush1.msra.mxu0 0.0
      %609 = vmatprep.subr.mxu0 0.0
      %610 = vmatpush1.msra.mxu0 0.0
      %611 = vmatprep.subr.mxu0 0.0
      %612 = vmatpush1.msra.mxu0 0.0
      %613 = vmatprep.subr.mxu0 0.0
      %614 = vmatpush1.msra.mxu0 0.0
      %615 = vmatprep.subr.mxu0 0.0
      %616 = vmatpush1.msra.mxu0 0.0
      %617 = vmatprep.subr.mxu0 0.0
      %618 = vmatpush1.msra.mxu0 0.0
      %619 = vmatprep.subr.mxu0 0.0
      %620 = vmatpush1.msra.mxu0 0.0
      %621 = vmatprep.subr.mxu0 0.0
      %622 = vmatpush1.msra.mxu0 0.0
      %623 = vmatprep.subr.mxu0 0.0
      %624 = vmatpush1.msra.mxu0 0.0
      %625 = vmatprep.subr.mxu0 0.0
      %626 = vmatpush1.msra.mxu0 0.0
      %627 = vmatprep.subr.mxu0 0.0
      %628 = vmatpush1.msra.mxu0 0.0
      %629 = vmatprep.subr.mxu0 0.0
      %630 = vmatpush1.msra.mxu0 0.0
      %631 = vmatprep.subr.mxu0 0.0
      %632 = vmatpush1.msra.mxu0 0.0
      %633 = vmatprep.subr.mxu0 0.0
      %634 = vmatpush1.msra.mxu0 0.0
      %635 = vmatprep.subr.mxu0 0.0
      %636 = vmatpush1.msra.mxu0 0.0
      %637 = vmatprep.subr.mxu0 0.0
      %638 = vmatpush1.msra.mxu0 0.0
      %639 = vmatprep.subr.mxu0 0.0
      %640 = vmatpush1.msra.mxu0 0.0
      %641 = vmatprep.subr.mxu0 0.0
      %642 = vmatpush1.msra.mxu0 0.0
      %643 = vmatprep.subr.mxu0 0.0
      %644 = vmatpush1.msra.mxu0 0.0
      %645 = vmatprep.subr.mxu0 0.0
      %646 = vmatpush1.msra.mxu0 0.0
      %647 = vmatprep.subr.mxu0 0.0
      %648 = vmatpush1.msra.mxu0 0.0
      %649 = vmatprep.subr.mxu0 0.0
      %650 = vmatpush1.msra.mxu0 0.0
      %651 = vmatprep.subr.mxu0 0.0
      %652 = vmatpush1.msra.mxu0 0.0
      %653 = vmatprep.subr.mxu0 0.0
      %654 = vmatpush1.msra.mxu0 0.0
      %655 = vmatprep.subr.mxu0 0.0
      %656 = vmatpush1.msra.mxu0 0.0
      %657 = vmatprep.subr.mxu0 0.0
      %658 = vmatpush1.msra.mxu0 0.0
      %659 = vmatprep.subr.mxu0 0.0
      %660 = vmatpush1.msra.mxu0 0.0
      %661 = vmatprep.subr.mxu0 0.0
      %662 = vmatpush1.msra.mxu0 0.0
      %663 = vmatprep.subr.mxu0 0.0
      %664 = vmatpush1.msra.mxu0 0.0
      %665 = vmatprep.mubr.f32.mxu0 0.0
      %666 = vmatmul.mubr.f32.gmra.mrb[0].mxu0 %v599
      %v667 = vpop.f32.mrb[0].mxu0
      %v668 = vadd.f32 0.0, %v667
      %v669 = vpop.f32.mrb[0].mxu0
      %670 = vdwg.mxu0
      %v671 = vmul.f32 %v109, %v109
      %v672 = vmul.f32 %v110, %v110
      %v674 = vsel %vm74, %v671, 0
      %v677 = vsel %vm74, %v672, 0
      %679 = vmatprep.subr.mxu0 0.0
      %680 = vmatpush1.msra.mxu0 %v50
      %681 = vmatprep.subr.mxu0 0.0
      %682 = vmatpush1.msra.mxu0 %v51
      %683 = vmatprep.subr.mxu0 0.0
      %684 = vmatpush1.msra.mxu0 0.0
      %685 = vmatprep.subr.mxu0 0.0
      %686 = vmatpush1.msra.mxu0 0.0
      %687 = vmatprep.subr.mxu0 0.0
      %688 = vmatpush1.msra.mxu0 0.0
      %689 = vmatprep.subr.mxu0 0.0
      %690 = vmatpush1.msra.mxu0 0.0
      %691 = vmatprep.subr.mxu0 0.0
      %692 = vmatpush1.msra.mxu0 0.0
      %693 = vmatprep.subr.mxu0 0.0
      %694 = vmatpush1.msra.mxu0 0.0
      %695 = vmatprep.subr.mxu0 0.0
      %696 = vmatpush1.msra.mxu0 0.0
      %697 = vmatprep.subr.mxu0 0.0
      %698 = vmatpush1.msra.mxu0 0.0
      %699 = vmatprep.subr.mxu0 0.0
      %700 = vmatpush1.msra.mxu0 0.0
      %701 = vmatprep.subr.mxu0 0.0
      %702 = vmatpush1.msra.mxu0 0.0
      %703 = vmatprep.subr.mxu0 0.0
      %704 = vmatpush1.msra.mxu0 0.0
      %705 = vmatprep.subr.mxu0 0.0
      %706 = vmatpush1.msra.mxu0 0.0
      %707 = vmatprep.subr.mxu0 0.0
      %708 = vmatpush1.msra.mxu0 0.0
      %709 = vmatprep.subr.mxu0 0.0
      %710 = vmatpush1.msra.mxu0 0.0
      %711 = vmatprep.subr.mxu0 0.0
      %712 = vmatpush1.msra.mxu0 0.0
      %713 = vmatprep.subr.mxu0 0.0
      %714 = vmatpush1.msra.mxu0 0.0
      %715 = vmatprep.subr.mxu0 0.0
      %716 = vmatpush1.msra.mxu0 0.0
      %717 = vmatprep.subr.mxu0 0.0
      %718 = vmatpush1.msra.mxu0 0.0
      %719 = vmatprep.subr.mxu0 0.0
      %720 = vmatpush1.msra.mxu0 0.0
      %721 = vmatprep.subr.mxu0 0.0
      %722 = vmatpush1.msra.mxu0 0.0
      %723 = vmatprep.subr.mxu0 0.0
      %724 = vmatpush1.msra.mxu0 0.0
      %725 = vmatprep.subr.mxu0 0.0
      %726 = vmatpush1.msra.mxu0 0.0
      %727 = vmatprep.subr.mxu0 0.0
      %728 = vmatpush1.msra.mxu0 0.0
      %729 = vmatprep.subr.mxu0 0.0
      %730 = vmatpush1.msra.mxu0 0.0
      %731 = vmatprep.subr.mxu0 0.0
      %732 = vmatpush1.msra.mxu0 0.0
      %733 = vmatprep.subr.mxu0 0.0
      %734 = vmatpush1.msra.mxu0 0.0
      %735 = vmatprep.subr.mxu0 0.0
      %736 = vmatpush1.msra.mxu0 0.0
      %737 = vmatprep.subr.mxu0 0.0
      %738 = vmatpush1.msra.mxu0 0.0
      %739 = vmatprep.subr.mxu0 0.0
      %740 = vmatpush1.msra.mxu0 0.0
      %741 = vmatprep.subr.mxu0 0.0
      %742 = vmatpush1.msra.mxu0 0.0
      %743 = vmatprep.mubr.f32.mxu0 0.0
      %744 = vmatmul.mubr.f32.gmra.mrb[0].mxu0 %v674
      %v745 = vpop.f32.mrb[0].mxu0
      %v746 = vadd.f32 0.0, %v745
      %v747 = vpop.f32.mrb[0].mxu0
      %748 = vmatprep.mubr.f32.mxu0 0.0
      %749 = vmatmul.mubr.f32.gmra.mrb[0].mxu0 %v677
      %v750 = vpop.f32.mrb[0].mxu0
      %v751 = vadd.f32 0.0, %v750
      %v752 = vpop.f32.mrb[0].mxu0
      %753 = vdwg.mxu0
      %754 = vxpose.xlu0.b32.start [1/16] %v746, 128
      %755 = vxpose.xlu0.b32.cont [2/16] %v751, 128
      %756 = vxpose.xlu0.b32.cont [3/16] 0.0, 128
      %757 = vxpose.xlu0.b32.cont [4/16] 0.0, 128
      %758 = vxpose.xlu0.b32.cont [5/16] 0.0, 128
      %759 = vxpose.xlu0.b32.cont [6/16] 0.0, 128
      %760 = vxpose.xlu0.b32.cont [7/16] 0.0, 128
      %761 = vxpose.xlu0.b32.cont [8/16] 0.0, 128
      %762 = vxpose.xlu0.b32.cont [9/16] 0.0, 128
      %763 = vxpose.xlu0.b32.cont [10/16] 0.0, 128
      %764 = vxpose.xlu0.b32.cont [11/16] 0.0, 128
      %765 = vxpose.xlu0.b32.cont [12/16] 0.0, 128
      %766 = vxpose.xlu0.b32.cont [13/16] 0.0, 128
      %767 = vxpose.xlu0.b32.cont [14/16] 0.0, 128
      %768 = vxpose.xlu0.b32.cont [15/16] 0.0, 128
      %769 = vxpose.xlu0.b32.end [16/16] 0.0, 128
      %v770 = vpop.trf.xlu0
      %v771 = vpop.trf.xlu0
      %v772 = vpop.trf.xlu0
      %v773 = vpop.trf.xlu0
      %v774 = vpop.trf.xlu0
      %v775 = vpop.trf.xlu0
      %v776 = vpop.trf.xlu0
      %v777 = vpop.trf.xlu0
      %v778 = vpop.trf.xlu0
      %v779 = vpop.trf.xlu0
      %v780 = vpop.trf.xlu0
      %v781 = vpop.trf.xlu0
      %v782 = vpop.trf.xlu0
      %v783 = vpop.trf.xlu0
      %v784 = vpop.trf.xlu0
      %v785 = vpop.trf.xlu0
      %v787 = vsel %vm74, %v770, 0
      %789 = vmatprep.subr.mxu0 0.0
      %790 = vmatpush1.msra.mxu0 %v52
      %791 = vmatprep.subr.mxu0 0.0
      %792 = vmatpush1.msra.mxu0 %v53
      %793 = vmatprep.subr.mxu0 0.0
      %794 = vmatpush1.msra.mxu0 0.0
      %795 = vmatprep.subr.mxu0 0.0
      %796 = vmatpush1.msra.mxu0 0.0
      %797 = vmatprep.subr.mxu0 0.0
      %798 = vmatpush1.msra.mxu0 0.0
      %799 = vmatprep.subr.mxu0 0.0
      %800 = vmatpush1.msra.mxu0 0.0
      %801 = vmatprep.subr.mxu0 0.0
      %802 = vmatpush1.msra.mxu0 0.0
      %803 = vmatprep.subr.mxu0 0.0
      %804 = vmatpush1.msra.mxu0 0.0
      %805 = vmatprep.subr.mxu0 0.0
      %806 = vmatpush1.msra.mxu0 0.0
      %807 = vmatprep.subr.mxu0 0.0
      %808 = vmatpush1.msra.mxu0 0.0
      %809 = vmatprep.subr.mxu0 0.0
      %810 = vmatpush1.msra.mxu0 0.0
      %811 = vmatprep.subr.mxu0 0.0
      %812 = vmatpush1.msra.mxu0 0.0
      %813 = vmatprep.subr.mxu0 0.0
      %814 = vmatpush1.msra.mxu0 0.0
      %815 = vmatprep.subr.mxu0 0.0
      %816 = vmatpush1.msra.mxu0 0.0
      %817 = vmatprep.subr.mxu0 0.0
      %818 = vmatpush1.msra.mxu0 0.0
      %819 = vmatprep.subr.mxu0 0.0
      %820 = vmatpush1.msra.mxu0 0.0
      %821 = vmatprep.subr.mxu0 0.0
      %822 = vmatpush1.msra.mxu0 0.0
      %823 = vmatprep.subr.mxu0 0.0
      %824 = vmatpush1.msra.mxu0 0.0
      %825 = vmatprep.subr.mxu0 0.0
      %826 = vmatpush1.msra.mxu0 0.0
      %827 = vmatprep.subr.mxu0 0.0
      %828 = vmatpush1.msra.mxu0 0.0
      %829 = vmatprep.subr.mxu0 0.0
      %830 = vmatpush1.msra.mxu0 0.0
      %831 = vmatprep.subr.mxu0 0.0
      %832 = vmatpush1.msra.mxu0 0.0
      %833 = vmatprep.subr.mxu0 0.0
      %834 = vmatpush1.msra.mxu0 0.0
      %835 = vmatprep.subr.mxu0 0.0
      %836 = vmatpush1.msra.mxu0 0.0
      %837 = vmatprep.subr.mxu0 0.0
      %838 = vmatpush1.msra.mxu0 0.0
      %839 = vmatprep.subr.mxu0 0.0
      %840 = vmatpush1.msra.mxu0 0.0
      %841 = vmatprep.subr.mxu0 0.0
      %842 = vmatpush1.msra.mxu0 0.0
      %843 = vmatprep.subr.mxu0 0.0
      %844 = vmatpush1.msra.mxu0 0.0
      %845 = vmatprep.subr.mxu0 0.0
      %846 = vmatpush1.msra.mxu0 0.0
      %847 = vmatprep.subr.mxu0 0.0
      %848 = vmatpush1.msra.mxu0 0.0
      %849 = vmatprep.subr.mxu0 0.0
      %850 = vmatpush1.msra.mxu0 0.0
      %851 = vmatprep.subr.mxu0 0.0
      %852 = vmatpush1.msra.mxu0 0.0
      %853 = vmatprep.mubr.f32.mxu0 0.0
      %854 = vmatmul.mubr.f32.gmra.mrb[0].mxu0 %v787
      %v855 = vpop.f32.mrb[0].mxu0
      %v856 = vadd.f32 0.0, %v855
      %v857 = vpop.f32.mrb[0].mxu0
      %858 = vdwg.mxu0
      %v859 = vmul.f32 %v105, %v109
      %v860 = vmul.f32 %v106, %v110
      %v862 = vsel %vm74, %v859, 0
      %v865 = vsel %vm74, %v860, 0
      %867 = vmatprep.subr.mxu0 0.0
      %868 = vmatpush1.msra.mxu0 %v50
      %869 = vmatprep.subr.mxu0 0.0
      %870 = vmatpush1.msra.mxu0 %v51
      %871 = vmatprep.subr.mxu0 0.0
      %872 = vmatpush1.msra.mxu0 0.0
      %873 = vmatprep.subr.mxu0 0.0
      %874 = vmatpush1.msra.mxu0 0.0
      %875 = vmatprep.subr.mxu0 0.0
      %876 = vmatpush1.msra.mxu0 0.0
      %877 = vmatprep.subr.mxu0 0.0
      %878 = vmatpush1.msra.mxu0 0.0
      %879 = vmatprep.subr.mxu0 0.0
      %880 = vmatpush1.msra.mxu0 0.0
      %881 = vmatprep.subr.mxu0 0.0
      %882 = vmatpush1.msra.mxu0 0.0
      %883 = vmatprep.subr.mxu0 0.0
      %884 = vmatpush1.msra.mxu0 0.0
      %885 = vmatprep.subr.mxu0 0.0
      %886 = vmatpush1.msra.mxu0 0.0
      %887 = vmatprep.subr.mxu0 0.0
      %888 = vmatpush1.msra.mxu0 0.0
      %889 = vmatprep.subr.mxu0 0.0
      %890 = vmatpush1.msra.mxu0 0.0
      %891 = vmatprep.subr.mxu0 0.0
      %892 = vmatpush1.msra.mxu0 0.0
      %893 = vmatprep.subr.mxu0 0.0
      %894 = vmatpush1.msra.mxu0 0.0
      %895 = vmatprep.subr.mxu0 0.0
      %896 = vmatpush1.msra.mxu0 0.0
      %897 = vmatprep.subr.mxu0 0.0
      %898 = vmatpush1.msra.mxu0 0.0
      %899 = vmatprep.subr.mxu0 0.0
      %900 = vmatpush1.msra.mxu0 0.0
      %901 = vmatprep.subr.mxu0 0.0
      %902 = vmatpush1.msra.mxu0 0.0
      %903 = vmatprep.subr.mxu0 0.0
      %904 = vmatpush1.msra.mxu0 0.0
      %905 = vmatprep.subr.mxu0 0.0
      %906 = vmatpush1.msra.mxu0 0.0
      %907 = vmatprep.subr.mxu0 0.0
      %908 = vmatpush1.msra.mxu0 0.0
      %909 = vmatprep.subr.mxu0 0.0
      %910 = vmatpush1.msra.mxu0 0.0
      %911 = vmatprep.subr.mxu0 0.0
      %912 = vmatpush1.msra.mxu0 0.0
      %913 = vmatprep.subr.mxu0 0.0
      %914 = vmatpush1.msra.mxu0 0.0
      %915 = vmatprep.subr.mxu0 0.0
      %916 = vmatpush1.msra.mxu0 0.0
      %917 = vmatprep.subr.mxu0 0.0
      %918 = vmatpush1.msra.mxu0 0.0
      %919 = vmatprep.subr.mxu0 0.0
      %920 = vmatpush1.msra.mxu0 0.0
      %921 = vmatprep.subr.mxu0 0.0
      %922 = vmatpush1.msra.mxu0 0.0
      %923 = vmatprep.subr.mxu0 0.0
      %924 = vmatpush1.msra.mxu0 0.0
      %925 = vmatprep.subr.mxu0 0.0
      %926 = vmatpush1.msra.mxu0 0.0
      %927 = vmatprep.subr.mxu0 0.0
      %928 = vmatpush1.msra.mxu0 0.0
      %929 = vmatprep.subr.mxu0 0.0
      %930 = vmatpush1.msra.mxu0 0.0
      %931 = vmatprep.mubr.f32.mxu0 0.0
      %932 = vmatmul.mubr.f32.gmra.mrb[0].mxu0 %v862
      %v933 = vpop.f32.mrb[0].mxu0
      %v934 = vadd.f32 0.0, %v933
      %v935 = vpop.f32.mrb[0].mxu0
      %936 = vmatprep.mubr.f32.mxu0 0.0
      %937 = vmatmul.mubr.f32.gmra.mrb[0].mxu0 %v865
      %v938 = vpop.f32.mrb[0].mxu0
      %v939 = vadd.f32 0.0, %v938
      %v940 = vpop.f32.mrb[0].mxu0
      %941 = vdwg.mxu0
      %942 = vxpose.xlu0.b32.start [1/16] %v934, 128
      %943 = vxpose.xlu0.b32.cont [2/16] %v939, 128
      %944 = vxpose.xlu0.b32.cont [3/16] 0.0, 128
      %945 = vxpose.xlu0.b32.cont [4/16] 0.0, 128
      %946 = vxpose.xlu0.b32.cont [5/16] 0.0, 128
      %947 = vxpose.xlu0.b32.cont [6/16] 0.0, 128
      %948 = vxpose.xlu0.b32.cont [7/16] 0.0, 128
      %949 = vxpose.xlu0.b32.cont [8/16] 0.0, 128
      %950 = vxpose.xlu0.b32.cont [9/16] 0.0, 128
      %951 = vxpose.xlu0.b32.cont [10/16] 0.0, 128
      %952 = vxpose.xlu0.b32.cont [11/16] 0.0, 128
      %953 = vxpose.xlu0.b32.cont [12/16] 0.0, 128
      %954 = vxpose.xlu0.b32.cont [13/16] 0.0, 128
      %955 = vxpose.xlu0.b32.cont [14/16] 0.0, 128
      %956 = vxpose.xlu0.b32.cont [15/16] 0.0, 128
      %957 = vxpose.xlu0.b32.end [16/16] 0.0, 128
      %v958 = vpop.trf.xlu0
      %v959 = vpop.trf.xlu0
      %v960 = vpop.trf.xlu0
      %v961 = vpop.trf.xlu0
      %v962 = vpop.trf.xlu0
      %v963 = vpop.trf.xlu0
      %v964 = vpop.trf.xlu0
      %v965 = vpop.trf.xlu0
      %v966 = vpop.trf.xlu0
      %v967 = vpop.trf.xlu0
      %v968 = vpop.trf.xlu0
      %v969 = vpop.trf.xlu0
      %v970 = vpop.trf.xlu0
      %v971 = vpop.trf.xlu0
      %v972 = vpop.trf.xlu0
      %v973 = vpop.trf.xlu0
      %v975 = vsel %vm74, %v958, 0
      %977 = vmatprep.subr.mxu0 0.0
      %978 = vmatpush1.msra.mxu0 %v52
      %979 = vmatprep.subr.mxu0 0.0
      %980 = vmatpush1.msra.mxu0 %v53
      %981 = vmatprep.subr.mxu0 0.0
      %982 = vmatpush1.msra.mxu0 0.0
      %983 = vmatprep.subr.mxu0 0.0
      %984 = vmatpush1.msra.mxu0 0.0
      %985 = vmatprep.subr.mxu0 0.0
      %986 = vmatpush1.msra.mxu0 0.0
      %987 = vmatprep.subr.mxu0 0.0
      %988 = vmatpush1.msra.mxu0 0.0
      %989 = vmatprep.subr.mxu0 0.0
      %990 = vmatpush1.msra.mxu0 0.0
      %991 = vmatprep.subr.mxu0 0.0
      %992 = vmatpush1.msra.mxu0 0.0
      %993 = vmatprep.subr.mxu0 0.0
      %994 = vmatpush1.msra.mxu0 0.0
      %995 = vmatprep.subr.mxu0 0.0
      %996 = vmatpush1.msra.mxu0 0.0
      %997 = vmatprep.subr.mxu0 0.0
      %998 = vmatpush1.msra.mxu0 0.0
      %999 = vmatprep.subr.mxu0 0.0
      %1000 = vmatpush1.msra.mxu0 0.0
      %1001 = vmatprep.subr.mxu0 0.0
      %1002 = vmatpush1.msra.mxu0 0.0
      %1003 = vmatprep.subr.mxu0 0.0
      %1004 = vmatpush1.msra.mxu0 0.0
      %1005 = vmatprep.subr.mxu0 0.0
      %1006 = vmatpush1.msra.mxu0 0.0
      %1007 = vmatprep.subr.mxu0 0.0
      %1008 = vmatpush1.msra.mxu0 0.0
      %1009 = vmatprep.subr.mxu0 0.0
      %1010 = vmatpush1.msra.mxu0 0.0
      %1011 = vmatprep.subr.mxu0 0.0
      %1012 = vmatpush1.msra.mxu0 0.0
      %1013 = vmatprep.subr.mxu0 0.0
      %1014 = vmatpush1.msra.mxu0 0.0
      %1015 = vmatprep.subr.mxu0 0.0
      %1016 = vmatpush1.msra.mxu0 0.0
      %1017 = vmatprep.subr.mxu0 0.0
      %1018 = vmatpush1.msra.mxu0 0.0
      %1019 = vmatprep.subr.mxu0 0.0
      %1020 = vmatpush1.msra.mxu0 0.0
      %1021 = vmatprep.subr.mxu0 0.0
      %1022 = vmatpush1.msra.mxu0 0.0
      %1023 = vmatprep.subr.mxu0 0.0
      %1024 = vmatpush1.msra.mxu0 0.0
      %1025 = vmatprep.subr.mxu0 0.0
      %1026 = vmatpush1.msra.mxu0 0.0
      %1027 = vmatprep.subr.mxu0 0.0
      %1028 = vmatpush1.msra.mxu0 0.0
      %1029 = vmatprep.subr.mxu0 0.0
      %1030 = vmatpush1.msra.mxu0 0.0
      %1031 = vmatprep.subr.mxu0 0.0
      %1032 = vmatpush1.msra.mxu0 0.0
      %1033 = vmatprep.subr.mxu0 0.0
      %1034 = vmatpush1.msra.mxu0 0.0
      %1035 = vmatprep.subr.mxu0 0.0
      %1036 = vmatpush1.msra.mxu0 0.0
      %1037 = vmatprep.subr.mxu0 0.0
      %1038 = vmatpush1.msra.mxu0 0.0
      %1039 = vmatprep.subr.mxu0 0.0
      %1040 = vmatpush1.msra.mxu0 0.0
      %1041 = vmatprep.mubr.f32.mxu0 0.0
      %1042 = vmatmul.mubr.f32.gmra.mrb[0].mxu0 %v975
      %v1043 = vpop.f32.mrb[0].mxu0
      %v1044 = vadd.f32 0.0, %v1043
      %v1045 = vpop.f32.mrb[0].mxu0
      %1046 = vdwg.mxu0
      %v1047 = vmul.f32 %v294, %v294
      %v1048 = vmul.f32 %v480, %v480
      %v1049 = vmul.f32 %v294, %v480
      %v1050 = vsub.f32 %v668, %v1047
      %v1051 = vsub.f32 %v856, %v1048
      %v1052 = vsub.f32 %v1044, %v1049
      %v1053 = vmul.f32 %v1052, 2.0
      %v1054 = vadd.f32 %v1053, 0.0009
      %v1055 = vadd.f32 %v1050, %v1051
      %v1056 = vadd.f32 %v1055, 0.0009
      %v1057 = vrcp.pop %v1056
      %v1058 = vmul.f32 %v1054, %v1057
      %v1059 = vmul.f32 %v1049, 2.0
      %v1060 = vadd.f32 %v1059, 0.0001
      %v1061 = vadd.f32 %v1047, %v1048
      %v1062 = vadd.f32 %v1061, 0.0001
      %v1063 = vrcp.pop %v1062
      %v1064 = vmul.f32 %v1060, %v1063
      %v1065 = vmul.f32 %v1064, %v1058
      %vm1066 = vcmask 46080
      %v1067 = vsel %vm1066, %v1065, 0.0
      %1068 = vadd.xlane.f32.xlu0 %v1067
      %v1069 = vpop.xlane.xlu0 %1068
      %v1070 = vrot.slane %v1069, 4
      %v1071 = vadd.f32 %v1069, %v1070
      %v1072 = vrot.slane %v1071, 2
      %v1073 = vadd.f32 %v1071, %v1072
      %v1074 = vrot.slane %v1073, 1
      %v1075 = vadd.f32 %v1073, %v1074
      %s1076 = vtos %v1075
      %s1077 = sadd.f32 %s62, %s1076
    $region30: #{tpu_custom_call.1} parent=1 // loop_footer
      %s57 = sadd.s32 %s55, 1
    $region31: #{tpu_custom_call.1} parent=1 // loop_footer_branch
      %54 = sbr.rel target = $region27
    $region32: #{tpu_custom_call.1} parent=1 // loop_exit
      _
    %v1078 = vlaneseq
    %v1079 = vand.u32 %v1078, 127
    %vm1080 = vcmp.eq.s32.totalorder %v1079, 0
    %v1081 = vstv %s60
    %v1082 = vsel %vm1080, %v1081, 0.0
    %vm1083 = vcmp.eq.s32.totalorder %v1079, 1
    %v1084 = vstv %s61
    %v1085 = vsel %vm1083, %v1084, 0.0
    %v1086 = vadd.f32 %v1082, %v1085
    %vm1087 = vcmp.eq.s32.totalorder %v1079, 2
    %v1088 = vstv %s62
    %v1089 = vsel %vm1087, %v1088, 0.0
    %v1090 = vadd.f32 %v1086, %v1089
    %1091 = vst [vmem:[#allocation7] sm:$0xff] %v1090
    // Predicated region
    $region33: #{tpu_custom_call.1} parent=1 // pred_check
      _
    $region34: #{tpu_custom_call.1} parent=1 // pred_check_branch
      %1093 = sbr.rel (0) target = $region36
    $region35: #{tpu_custom_call.1} parent=1 // pred_region
      %s1095 = ssub.s32 128, 128
      %1096 = vsyncadd [#allocation4], %s1095
      %s1098 = sshll.u32 [#allocation7], 4
      %s1099 = int_to_ptr.vmem [resolvable:$true] %s1098
      %1101 = dma.vmem_to_hbm [thread:$0]  %s1099, 128, %s4, [#allocation4]
    $region36: #{tpu_custom_call.1} parent=1 // pred_fallthru
      _
    // Predicated region
    $region37: #{tpu_custom_call.1} parent=1 // pred_check
      _
    $region38: #{tpu_custom_call.1} parent=1 // pred_check_branch
      %1103 = sbr.rel (0) target = $region40
    $region39: #{tpu_custom_call.1} parent=1 // pred_region
      %1104 = dma.done [#allocation4], 128
    $region40: #{tpu_custom_call.1} parent=1 // pred_fallthru
      _
    %1105 = vsyncpa [#allocation3], 1
    %1106 = vsyncpa [#allocation6], 1
    %1107 = vsyncpa [#allocation4], 1

</llo_original>
